<compile_context>
chip_gen: v7x
topology: tpu7x:2x2x1
jax: 0.10.0
libtpu: 0.0.40
codegen_flags: <defaults>
</compile_context>

<pallas_src>
import jax
import jax.numpy as jnp
from jax.experimental import pallas as pl
from jax.experimental.pallas import tpu as pltpu

BN_EPS = 1e-5
VMEM_LIMIT_BYTES = 48 * 1024 * 1024   # safe on v5e/v6e (128 MiB) and v7x (64 MiB)


def _round_up(x, m):
    return ((x + m - 1) // m) * m


def _pad2(a, rows, cols, dtype):
    a = a.astype(dtype)
    return jnp.pad(a, ((0, rows - a.shape[0]), (0, cols - a.shape[1])))


def _compiler_params(dimension_semantics):
    cp_cls = getattr(pltpu, "CompilerParams", None)
    if cp_cls is None:  # fallback for older jax naming
        cp_cls = getattr(pltpu, "TPUCompilerParams")
    return cp_cls(dimension_semantics=dimension_semantics,
                  vmem_limit_bytes=VMEM_LIMIT_BYTES)


# ---------------------------------------------------------------------------
# Pass A: node messages  m0 = sigmoid(x0 @ W0 + b0)        grid: (N_tiles,)
# ---------------------------------------------------------------------------
def _node_message_kernel(x0_ref, w0_ref, b0_ref, m0_ref):
    x0 = x0_ref[...].astype(w0_ref.dtype)
    pre = jnp.dot(x0, w0_ref[...], preferred_element_type=jnp.float32) + b0_ref[...]
    m0_ref[...] = jax.nn.sigmoid(pre).astype(m0_ref.dtype)


# ---------------------------------------------------------------------------
# Pass B: a01 = B^T @ m0 (reduction over N tiles), then fused
#         m1 = sigmoid(x1 @ W1a + a01 @ W1b + b1) and
#         x1' = sigmoid(BN(x1) + a01)               grid: (E_tiles, N_tiles)
# ---------------------------------------------------------------------------
def _edge_update_kernel(bt_ref, m0_ref, x1_ref, w1a_ref, w1b_ref, b1_ref,
                        scale1_ref, shift1_ref, m1_ref, x1o_ref, acc_ref):
    k = pl.program_id(1)

    @pl.when(k == 0)
    def _():
        acc_ref[...] = jnp.zeros_like(acc_ref)

    # a01 partial: (te, tn) @ (tn, F) -> f32 accumulator in VMEM scratch
    acc_ref[...] += jnp.dot(bt_ref[...], m0_ref[...],
                            preferred_element_type=jnp.float32)

    @pl.when(k == pl.num_programs(1) - 1)
    def _():
        agg = acc_ref[...]                               # [te, F] f32
        x1 = x1_ref[...]                                 # [te, F] f32
        cdt = w1a_ref.dtype
        pre = (jnp.dot(x1.astype(cdt), w1a_ref[...],
                       preferred_element_type=jnp.float32)
               + jnp.dot(agg.astype(cdt), w1b_ref[...],
                         preferred_element_type=jnp.float32)
               + b1_ref[...])
        m1_ref[...] = jax.nn.sigmoid(pre).astype(m1_ref.dtype)
        x1_bn = x1 * scale1_ref[...] + shift1_ref[...]   # folded BatchNorm
        x1o_ref[...] = jax.nn.sigmoid(x1_bn + agg).astype(x1o_ref.dtype)


# ---------------------------------------------------------------------------
# Pass C: a10 = B @ m1 (reduction over E tiles), then fused
#         x0' = sigmoid(BN(x0) + a10)                grid: (N_tiles, E_tiles)
# ---------------------------------------------------------------------------
def _node_update_kernel(b_ref, m1_ref, x0_ref, scale0_ref, shift0_ref,
                        x0o_ref, acc_ref):
    k = pl.program_id(1)

    @pl.when(k == 0)
    def _():
        acc_ref[...] = jnp.zeros_like(acc_ref)

    acc_ref[...] += jnp.dot(b_ref[...], m1_ref[...],
                            preferred_element_type=jnp.float32)

    @pl.when(k == pl.num_programs(1) - 1)
    def _():
        x0 = x0_ref[...]
        x0_bn = x0 * scale0_ref[...] + shift0_ref[...]   # folded BatchNorm
        x0o_ref[...] = jax.nn.sigmoid(x0_bn + acc_ref[...]).astype(x0o_ref.dtype)


# ---------------------------------------------------------------------------
# Wrapper
# ---------------------------------------------------------------------------
def hmpnn_layer(x0, x1, B, params, *, compute_dtype=jnp.bfloat16,
                tile_n=512, tile_e=512):
    n_nodes, feat = x0.shape
    n_edges = x1.shape[0]
    f32 = jnp.float32

    # lane-dense feature dim; tile sizes multiples of 128 (both appear as a
    # trailing block dim of B / B^T)
    fp = _round_up(feat, 128)
    tn = min(tile_n, _round_up(n_nodes, 128))
    te = min(tile_e, _round_up(n_edges, 128))
    n_p = _round_up(n_nodes, tn)
    e_p = _round_up(n_edges, te)

    # activations stay f32 (accurate BN epilogue); cast to compute dtype only
    # at the MXU operands inside the kernels.
    x0p = _pad2(x0, n_p, fp, f32)
    x1p = _pad2(x1, e_p, fp, f32)

    # 0/1 incidence matrix: compute dtype (bf16 exact) halves its HBM stream;
    # B^T is prepared once in the wrapper so the kernels never transpose.
    Bp = _pad2(B, n_p, e_p, compute_dtype)
    BTp = Bp.T

    w0p = _pad2(params["w0"], fp, fp, compute_dtype)
    w1ap = _pad2(params["w1a"], fp, fp, compute_dtype)
    w1bp = _pad2(params["w1b"], fp, fp, compute_dtype)
    b0p = _pad2(params["b0"], 1, fp, f32)
    b1p = _pad2(params["b1"], 1, fp, f32)

    # fold eval-mode BatchNorm into per-feature scale/shift
    scale0 = params["g0"] / jnp.sqrt(params["rv0"] + BN_EPS)
    shift0 = params["beta0"] - params["rm0"] * scale0
    scale1 = params["g1"] / jnp.sqrt(params["rv1"] + BN_EPS)
    shift1 = params["beta1"] - params["rm1"] * scale1
    scale0p = _pad2(scale0, 1, fp, f32)
    shift0p = _pad2(shift0, 1, fp, f32)
    scale1p = _pad2(scale1, 1, fp, f32)
    shift1p = _pad2(shift1, 1, fp, f32)

    cparams_1d = _compiler_params(("parallel",))
    cparams_2d = _compiler_params(("parallel", "arbitrary"))

    # ---- Pass A: node messages --------------------------------------------
    m0 = pl.pallas_call(
        _node_message_kernel,
        out_shape=jax.ShapeDtypeStruct((n_p, fp), compute_dtype),
        grid_spec=pltpu.PrefetchScalarGridSpec(
            num_scalar_prefetch=0,
            grid=(n_p // tn,),
            in_specs=[pl.BlockSpec((tn, fp), lambda i: (i, 0)),
                      pl.BlockSpec((fp, fp), lambda i: (0, 0)),
                      pl.BlockSpec((1, fp), lambda i: (0, 0))],
            out_specs=pl.BlockSpec((tn, fp), lambda i: (i, 0))),
        compiler_params=cparams_1d,
    )(x0p, w0p, b0p)

    # ---- Pass B: edge aggregation + edge update ----------------------------
    m1, x1_out_p = pl.pallas_call(
        _edge_update_kernel,
        out_shape=(jax.ShapeDtypeStruct((e_p, fp), compute_dtype),
                   jax.ShapeDtypeStruct((e_p, fp), jnp.float32)),
        grid_spec=pltpu.PrefetchScalarGridSpec(
            num_scalar_prefetch=0,
            grid=(e_p // te, n_p // tn),
            in_specs=[pl.BlockSpec((te, tn), lambda e, k: (e, k)),   # B^T tile
                      pl.BlockSpec((tn, fp), lambda e, k: (k, 0)),   # m0 tile
                      pl.BlockSpec((te, fp), lambda e, k: (e, 0)),   # x1 tile
                      pl.BlockSpec((fp, fp), lambda e, k: (0, 0)),   # W1a
                      pl.BlockSpec((fp, fp), lambda e, k: (0, 0)),   # W1b
                      pl.BlockSpec((1, fp), lambda e, k: (0, 0)),    # b1
                      pl.BlockSpec((1, fp), lambda e, k: (0, 0)),    # bn scale1
                      pl.BlockSpec((1, fp), lambda e, k: (0, 0))],   # bn shift1
            out_specs=(pl.BlockSpec((te, fp), lambda e, k: (e, 0)),
                       pl.BlockSpec((te, fp), lambda e, k: (e, 0))),
            scratch_shapes=[pltpu.VMEM((te, fp), jnp.float32)]),
        compiler_params=cparams_2d,
    )(BTp, m0, x1p, w1ap, w1bp, b1p, scale1p, shift1p)

    # ---- Pass C: node aggregation + node update ----------------------------
    x0_out_p = pl.pallas_call(
        _node_update_kernel,
        out_shape=jax.ShapeDtypeStruct((n_p, fp), jnp.float32),
        grid_spec=pltpu.PrefetchScalarGridSpec(
            num_scalar_prefetch=0,
            grid=(n_p // tn, e_p // te),
            in_specs=[pl.BlockSpec((tn, te), lambda n, k: (n, k)),   # B tile
                      pl.BlockSpec((te, fp), lambda n, k: (k, 0)),   # m1 tile
                      pl.BlockSpec((tn, fp), lambda n, k: (n, 0)),   # x0 tile
                      pl.BlockSpec((1, fp), lambda n, k: (0, 0)),    # bn scale0
                      pl.BlockSpec((1, fp), lambda n, k: (0, 0))],   # bn shift0
            out_specs=pl.BlockSpec((tn, fp), lambda n, k: (n, 0)),
            scratch_shapes=[pltpu.VMEM((tn, fp), jnp.float32)]),
        compiler_params=cparams_2d,
    )(Bp, m1, x0p, scale0p, shift0p)

    return x0_out_p[:n_nodes, :feat], x1_out_p[:n_edges, :feat]


# ---------------------------------------------------------------------------
# Pure-JAX reference (f32) and parameter init
# ---------------------------------------------------------------------------
def hmpnn_reference(x0, x1, B, p):
    m0 = jax.nn.sigmoid(x0 @ p["w0"] + p["b0"])
    agg_n2e = B.T @ m0
    m1 = jax.nn.sigmoid(x1 @ p["w1a"] + agg_n2e @ p["w1b"] + p["b1"])
    agg_e2n = B @ m1
    x0_bn = (x0 - p["rm0"]) / jnp.sqrt(p["rv0"] + BN_EPS) * p["g0"] + p["beta0"]
    x1_bn = (x1 - p["rm1"]) / jnp.sqrt(p["rv1"] + BN_EPS) * p["g1"] + p["beta1"]
    return jax.nn.sigmoid(x0_bn + agg_e2n), jax.nn.sigmoid(x1_bn + agg_n2e)


def init_params(key, feat):
    ks = jax.random.split(key, 8)
    lim0 = 1.0 / jnp.sqrt(feat)
    lim1 = 1.0 / jnp.sqrt(2.0 * feat)
    # node->hyperedge Linear(F, F); stored already transposed for x @ W
    w0 = jax.random.uniform(ks[0], (feat, feat), jnp.float32, -lim0, lim0)
    b0 = jax.random.uniform(ks[1], (1, feat), jnp.float32, -lim0, lim0)
    # hyperedge->node Linear(2F, F): split into the x_1 half and the agg half
    w1a = jax.random.uniform(ks[2], (feat, feat), jnp.float32, -lim1, lim1)
    w1b = jax.random.uniform(ks[3], (feat, feat), jnp.float32, -lim1, lim1)
    b1 = jax.random.uniform(ks[4], (1, feat), jnp.float32, -lim1, lim1)
    # BatchNorm1d params / running stats (fresh-init defaults, eval mode)
    ones = jnp.ones((1, feat), jnp.float32)
    zeros = jnp.zeros((1, feat), jnp.float32)
    return {
        "w0": w0, "b0": b0, "w1a": w1a, "w1b": w1b, "b1": b1,
        "g0": ones, "beta0": zeros, "rm0": zeros, "rv0": ones,
        "g1": ones, "beta1": zeros, "rm1": zeros, "rv1": ones,
    }


if __name__ == "__main__":
    n_nodes, n_edges, feat = 16, 8, 32
    key = jax.random.PRNGKey(0)
    k_x0, k_x1, k_b, k_p = jax.random.split(key, 4)

    x0 = jax.random.normal(k_x0, (n_nodes, feat), jnp.float32)
    x1 = jax.random.normal(k_x1, (n_edges, feat), jnp.float32)
    # dense 0/1 incidence matrix B_1 [n_nodes, n_edges]
    B = (jax.random.uniform(k_b, (n_nodes, n_edges)) < 0.4).astype(jnp.float32)
    params = init_params(k_p, feat)

    x0_ref, x1_ref = hmpnn_reference(x0, x1, B, params)

    # f32 compute path: tight numerical check of the tiled structure
    x0_f32, x1_f32 = hmpnn_layer(x0, x1, B, params, compute_dtype=jnp.float32)
    jax.block_until_ready((x0_f32, x1_f32))
    assert x0_f32.shape == (n_nodes, feat) and x1_f32.shape == (n_edges, feat)
    assert jnp.allclose(x0_f32, x0_ref, atol=1e-4, rtol=1e-4)
    assert jnp.allclose(x1_f32, x1_ref, atol=1e-4, rtol=1e-4)

    # default bf16 MXU path: looser tolerance (f32 accumulation, bf16 operands)
    x0_out, x1_out = hmpnn_layer(x0, x1, B, params)
    jax.block_until_ready((x0_out, x1_out))
    assert x0_out.shape == (n_nodes, feat) and x1_out.shape == (n_edges, feat)
    assert jnp.allclose(x0_out, x0_ref, atol=3e-2, rtol=3e-2)
    assert jnp.allclose(x1_out, x1_ref, atol=3e-2, rtol=3e-2)

    print("KERNEL_OK")
</pallas_src>

<mosaic_0001>
module attributes {stable_mosaic.version = 11 : i64} {
  func.func @_node_message_kernel(%arg0: i32, %arg1: memref<128x128xf32, #tpu.memory_space<vmem>>, %arg2: memref<128x128xf32, #tpu.memory_space<vmem>>, %arg3: memref<1x128xf32, #tpu.memory_space<vmem>>, %arg4: memref<128x128xf32, #tpu.memory_space<vmem>>) attributes {dimension_semantics = [#tpu.dimension_semantics<parallel>], iteration_bounds = array<i64: 1>, scalar_prefetch = 0 : i64, scratch_operands = 0 : i64, tpu.core_type = #tpu.core_type<tc>, window_params = [{transform_indices = @transform_0, window_bounds = array<i64: 128, 128>}, {pipeline_mode = #tpu.pipeline_mode<synchronous>, transform_indices = @transform_1, window_bounds = array<i64: 128, 128>}, {pipeline_mode = #tpu.pipeline_mode<synchronous>, transform_indices = @transform_2, window_bounds = array<i64: 1, 128>}, {transform_indices = @transform_3, window_bounds = array<i64: 128, 128>}]} {
    %c0 = arith.constant 0 : index
    %c0_0 = arith.constant 0 : index
    %0 = vector.load %arg1[%c0, %c0_0] : memref<128x128xf32, #tpu.memory_space<vmem>>, vector<128x128xf32>
    %c0_1 = arith.constant 0 : index
    %c0_2 = arith.constant 0 : index
    %1 = vector.load %arg2[%c0_1, %c0_2] : memref<128x128xf32, #tpu.memory_space<vmem>>, vector<128x128xf32>
    %cst = arith.constant dense<0.000000e+00> : vector<128x128xf32>
    %2 = tpu.matmul %0, %1, %cst {dimension_numbers = #tpu.dot_dimension_numbers<[1], [0], [0], [1], [0, 0, 1, 1], [], []>} : vector<128x128xf32>, vector<128x128xf32>, vector<128x128xf32> -> vector<128x128xf32>
    %c0_3 = arith.constant 0 : index
    %c0_4 = arith.constant 0 : index
    %3 = vector.load %arg3[%c0_3, %c0_4] : memref<1x128xf32, #tpu.memory_space<vmem>>, vector<1x128xf32>
    %4 = vector.broadcast %3 : vector<1x128xf32> to vector<128x128xf32>
    %5 = arith.addf %2, %4 : vector<128x128xf32>
    %6 = arith.negf %5 : vector<128x128xf32>
    %7 = math.exp %6 : vector<128x128xf32>
    %cst_5 = arith.constant 1.000000e+00 : f32
    %8 = vector.broadcast %cst_5 : f32 to vector<128x128xf32>
    %9 = arith.addf %8, %7 : vector<128x128xf32>
    %10 = arith.divf %8, %9 : vector<128x128xf32>
    %c0_6 = arith.constant 0 : index
    %c0_7 = arith.constant 0 : index
    %11 = vector.load %arg4[%c0_6, %c0_7] : memref<128x128xf32, #tpu.memory_space<vmem>>, vector<128x128xf32>
    tpu.vector_store %arg4[%c0_6, %c0_7], %10 {strides = array<i32>} : memref<128x128xf32, #tpu.memory_space<vmem>>, vector<128x128xf32>,
    return
  }
  func.func @transform_0(%arg0: i32) -> (i32, i32) {
    %c0_i32 = arith.constant 0 : i32
    %c0_i32_0 = arith.constant 0 : i32
    return %arg0, %c0_i32 : i32, i32
  }
  func.func @transform_1(%arg0: i32) -> (i32, i32) {
    %c0_i32 = arith.constant 0 : i32
    %c0_i32_0 = arith.constant 0 : i32
    %c0_i32_1 = arith.constant 0 : i32
    return %c0_i32, %c0_i32_0 : i32, i32
  }
  func.func @transform_2(%arg0: i32) -> (i32, i32) {
    %c0_i32 = arith.constant 0 : i32
    %c0_i32_0 = arith.constant 0 : i32
    %c0_i32_1 = arith.constant 0 : i32
    return %c0_i32, %c0_i32_0 : i32, i32
  }
  func.func @transform_3(%arg0: i32) -> (i32, i32) {
    %c0_i32 = arith.constant 0 : i32
    %c0_i32_0 = arith.constant 0 : i32
    return %arg0, %c0_i32 : i32, i32
  }
}

</mosaic_0001>

<llo_original>
// kernel: tpu_custom_call.1
$region0: #{tpu_custom_call.1}
  #allocation0 [shape = 'u32[]', space=smem, size = 0x4, offset = 0x4, fixed_abs, tag = 'smem constant byte address 0x4 - core index']
  #allocation1 [shape = 'u32[144,128]{1,0:T(1,128)}', space=vmem, size = 0x12000, scoped, tag = 'internal scratch']
  %s0 = inlined_call_operand.hbm [shape: f32[128,128], index: 0, kind: input, shape index: {}]
  %s1 = inlined_call_operand.hbm [shape: f32[128,128], index: 1, kind: input, shape index: {}]
  %s2 = inlined_call_operand.vmem [shape: f32[1,128], index: 2, kind: input, shape index: {}]
  %s3 = inlined_call_operand.hbm [shape: f32[128,128], index: 3, kind: output, shape index: {}]
  %s4 = sld [smem:[#allocation0]]
  $region30: #{tpu_custom_call.1} parent=0
    _
  %s6 = ssub.s32 1, %s4
  %s7 = scalar_select 0, %s6, %s4
  $region1: #{tpu_custom_call.1} parent=0
    #allocation2 [shape = 'u8[65536]{0}', space=vmem, size = 0x10000, scoped, tag = 'input window, operand 0, single buffered']
    #allocation3 [shape = 's32[1]{0}', space=sflag, size = 0x4, scoped, tag = 'scoped memory for tpu_custom_call.1']
    #allocation4 [shape = 's32[1]{0}', space=sflag, size = 0x4, scoped, tag = 'scoped memory for tpu_custom_call.1']
    #allocation5 [shape = 'u8[65536]{0}', space=vmem, size = 0x10000, scoped, tag = 'input window, operand 1, single buffered']
    #allocation6 [shape = 's32[1]{0}', space=sflag, size = 0x4, scoped, tag = 'scoped memory for tpu_custom_call.1']
    #allocation7 [shape = 'u8[65536]{0}', space=vmem, size = 0x10000, scoped, tag = 'output window, operand 0, single buffered']
    %8 = vsyncpa [#allocation3], 0
    %9 = vsyncpa [#allocation6], 0
    %10 = vsyncpa [#allocation4], 0
    // Predicated region
    $region2: #{tpu_custom_call.1} parent=1 // pred_check
      _
    $region3: #{tpu_custom_call.1} parent=1 // pred_check_branch
      %12 = sbr.rel (0) target = $region5
    $region4: #{tpu_custom_call.1} parent=1 // pred_region
      %s14 = ssub.s32 2048, 2048
      %15 = vsyncadd [#allocation3], %s14
      %s16 = sshll.u32 [#allocation2], 4
      %s17 = int_to_ptr.vmem [resolvable:$true] %s16
      %22 = dma.hbm_to_vmem [thread:$0]  %s0, 2048, %s17, [#allocation3], 128, 128, 8
    $region5: #{tpu_custom_call.1} parent=1 // pred_fallthru
      _
    // Predicated region
    $region6: #{tpu_custom_call.1} parent=1 // pred_check
      _
    $region7: #{tpu_custom_call.1} parent=1 // pred_check_branch
      %24 = sbr.rel (0) target = $region9
    $region8: #{tpu_custom_call.1} parent=1 // pred_region
      %s26 = ssub.s32 2048, 2048
      %27 = vsyncadd [#allocation6], %s26
      %s28 = sshll.u32 [#allocation5], 4
      %s29 = int_to_ptr.vmem [resolvable:$true] %s28
      %34 = dma.hbm_to_vmem [thread:$0]  %s1, 2048, %s29, [#allocation6], 128, 128, 8
    $region9: #{tpu_custom_call.1} parent=1 // pred_fallthru
      _
    // Predicated region
    $region10: #{tpu_custom_call.1} parent=1 // pred_check
      _
    $region11: #{tpu_custom_call.1} parent=1 // pred_check_branch
      %36 = sbr.rel (0) target = $region13
    $region12: #{tpu_custom_call.1} parent=1 // pred_region
      _
    $region13: #{tpu_custom_call.1} parent=1 // pred_fallthru
      _
    // Predicated region
    $region14: #{tpu_custom_call.1} parent=1 // pred_check
      _
    $region15: #{tpu_custom_call.1} parent=1 // pred_check_branch
      %38 = sbr.rel (0) target = $region17
    $region16: #{tpu_custom_call.1} parent=1 // pred_region
      %39 = dma.done [#allocation3], 2048
    $region17: #{tpu_custom_call.1} parent=1 // pred_fallthru
      _
    // Predicated region
    $region18: #{tpu_custom_call.1} parent=1 // pred_check
      _
    $region19: #{tpu_custom_call.1} parent=1 // pred_check_branch
      %41 = sbr.rel (0) target = $region21
    $region20: #{tpu_custom_call.1} parent=1 // pred_region
      %42 = dma.done [#allocation6], 2048
    $region21: #{tpu_custom_call.1} parent=1 // pred_fallthru
      _
    %v43 = vld [vmem:[#allocation2] sm:$0xff]
    %v44 = vld [vmem:[#allocation2 + $0x8] sm:$0xff]
    %v45 = vld [vmem:[#allocation2 + $0x10] sm:$0xff]
    %v46 = vld [vmem:[#allocation2 + $0x18] sm:$0xff]
    %v47 = vld [vmem:[#allocation2 + $0x20] sm:$0xff]
    %v48 = vld [vmem:[#allocation2 + $0x28] sm:$0xff]
    %v49 = vld [vmem:[#allocation2 + $0x30] sm:$0xff]
    %v50 = vld [vmem:[#allocation2 + $0x38] sm:$0xff]
    %v51 = vld [vmem:[#allocation2 + $0x40] sm:$0xff]
    %v52 = vld [vmem:[#allocation2 + $0x48] sm:$0xff]
    %v53 = vld [vmem:[#allocation2 + $0x50] sm:$0xff]
    %v54 = vld [vmem:[#allocation2 + $0x58] sm:$0xff]
    %v55 = vld [vmem:[#allocation2 + $0x60] sm:$0xff]
    %v56 = vld [vmem:[#allocation2 + $0x68] sm:$0xff]
    %v57 = vld [vmem:[#allocation2 + $0x70] sm:$0xff]
    %v58 = vld [vmem:[#allocation2 + $0x78] sm:$0xff]
    %v59 = vld [vmem:[#allocation5] sm:$0xff]
    %v60 = vld [vmem:[#allocation5 + $0x8] sm:$0xff]
    %v61 = vld [vmem:[#allocation5 + $0x10] sm:$0xff]
    %v62 = vld [vmem:[#allocation5 + $0x18] sm:$0xff]
    %v63 = vld [vmem:[#allocation5 + $0x20] sm:$0xff]
    %v64 = vld [vmem:[#allocation5 + $0x28] sm:$0xff]
    %v65 = vld [vmem:[#allocation5 + $0x30] sm:$0xff]
    %v66 = vld [vmem:[#allocation5 + $0x38] sm:$0xff]
    %v67 = vld [vmem:[#allocation5 + $0x40] sm:$0xff]
    %v68 = vld [vmem:[#allocation5 + $0x48] sm:$0xff]
    %v69 = vld [vmem:[#allocation5 + $0x50] sm:$0xff]
    %v70 = vld [vmem:[#allocation5 + $0x58] sm:$0xff]
    %v71 = vld [vmem:[#allocation5 + $0x60] sm:$0xff]
    %v72 = vld [vmem:[#allocation5 + $0x68] sm:$0xff]
    %v73 = vld [vmem:[#allocation5 + $0x70] sm:$0xff]
    %v74 = vld [vmem:[#allocation5 + $0x78] sm:$0xff]
    %v75 = vld [vmem:[%s2] sm:$0x1]
    %v77 = vlaneseq
    %v78 = vshrl.u32 %v77, 7
    %v79 = vsub.s32 0, %v78
    %v80 = vrot.slane %v75, %v79
    %82 = vmatprep.subr.mxu0 0.0
    %83 = vmatpush1.msra.mxu0 %v59
    %84 = vmatprep.subr.mxu0 0.0
    %85 = vmatpush1.msra.mxu0 %v60
    %86 = vmatprep.subr.mxu0 0.0
    %87 = vmatpush1.msra.mxu0 %v61
    %88 = vmatprep.subr.mxu0 0.0
    %89 = vmatpush1.msra.mxu0 %v62
    %90 = vmatprep.subr.mxu0 0.0
    %91 = vmatpush1.msra.mxu0 %v63
    %92 = vmatprep.subr.mxu0 0.0
    %93 = vmatpush1.msra.mxu0 %v64
    %94 = vmatprep.subr.mxu0 0.0
    %95 = vmatpush1.msra.mxu0 %v65
    %96 = vmatprep.subr.mxu0 0.0
    %97 = vmatpush1.msra.mxu0 %v66
    %98 = vmatprep.subr.mxu0 0.0
    %99 = vmatpush1.msra.mxu0 %v67
    %100 = vmatprep.subr.mxu0 0.0
    %101 = vmatpush1.msra.mxu0 %v68
    %102 = vmatprep.subr.mxu0 0.0
    %103 = vmatpush1.msra.mxu0 %v69
    %104 = vmatprep.subr.mxu0 0.0
    %105 = vmatpush1.msra.mxu0 %v70
    %106 = vmatprep.subr.mxu0 0.0
    %107 = vmatpush1.msra.mxu0 %v71
    %108 = vmatprep.subr.mxu0 0.0
    %109 = vmatpush1.msra.mxu0 %v72
    %110 = vmatprep.subr.mxu0 0.0
    %111 = vmatpush1.msra.mxu0 %v73
    %112 = vmatprep.subr.mxu0 0.0
    %113 = vmatpush1.msra.mxu0 %v74
    %114 = vmatprep.subr.mxu0 0.0
    %115 = vmatpush1.msra.mxu0 0.0
    %116 = vmatprep.subr.mxu0 0.0
    %117 = vmatpush1.msra.mxu0 0.0
    %118 = vmatprep.subr.mxu0 0.0
    %119 = vmatpush1.msra.mxu0 0.0
    %120 = vmatprep.subr.mxu0 0.0
    %121 = vmatpush1.msra.mxu0 0.0
    %122 = vmatprep.subr.mxu0 0.0
    %123 = vmatpush1.msra.mxu0 0.0
    %124 = vmatprep.subr.mxu0 0.0
    %125 = vmatpush1.msra.mxu0 0.0
    %126 = vmatprep.subr.mxu0 0.0
    %127 = vmatpush1.msra.mxu0 0.0
    %128 = vmatprep.subr.mxu0 0.0
    %129 = vmatpush1.msra.mxu0 0.0
    %130 = vmatprep.subr.mxu0 0.0
    %131 = vmatpush1.msra.mxu0 0.0
    %132 = vmatprep.subr.mxu0 0.0
    %133 = vmatpush1.msra.mxu0 0.0
    %134 = vmatprep.subr.mxu0 0.0
    %135 = vmatpush1.msra.mxu0 0.0
    %136 = vmatprep.subr.mxu0 0.0
    %137 = vmatpush1.msra.mxu0 0.0
    %138 = vmatprep.subr.mxu0 0.0
    %139 = vmatpush1.msra.mxu0 0.0
    %140 = vmatprep.subr.mxu0 0.0
    %141 = vmatpush1.msra.mxu0 0.0
    %142 = vmatprep.subr.mxu0 0.0
    %143 = vmatpush1.msra.mxu0 0.0
    %144 = vmatprep.subr.mxu0 0.0
    %145 = vmatpush1.msra.mxu0 0.0
    %146 = vmatprep.mubr.f32.mxu0 0.0
    %147 = vmatmul.mubr.f32.gmra.mrb[0].mxu0 %v43
    %v148 = vpop.f32.mrb[0].mxu0
    %v149 = vadd.f32 %v80, %v148
    %v150 = vpop.f32.mrb[0].mxu0
    %151 = vmatprep.mubr.f32.mxu0 0.0
    %152 = vmatmul.mubr.f32.gmra.mrb[0].mxu0 %v44
    %v153 = vpop.f32.mrb[0].mxu0
    %v154 = vadd.f32 %v80, %v153
    %v155 = vpop.f32.mrb[0].mxu0
    %156 = vmatprep.mubr.f32.mxu0 0.0
    %157 = vmatmul.mubr.f32.gmra.mrb[0].mxu0 %v45
    %v158 = vpop.f32.mrb[0].mxu0
    %v159 = vadd.f32 %v80, %v158
    %v160 = vpop.f32.mrb[0].mxu0
    %161 = vmatprep.mubr.f32.mxu0 0.0
    %162 = vmatmul.mubr.f32.gmra.mrb[0].mxu0 %v46
    %v163 = vpop.f32.mrb[0].mxu0
    %v164 = vadd.f32 %v80, %v163
    %v165 = vpop.f32.mrb[0].mxu0
    %166 = vmatprep.mubr.f32.mxu0 0.0
    %167 = vmatmul.mubr.f32.gmra.mrb[0].mxu0 %v47
    %v168 = vpop.f32.mrb[0].mxu0
    %v169 = vadd.f32 %v80, %v168
    %v170 = vpop.f32.mrb[0].mxu0
    %171 = vmatprep.mubr.f32.mxu0 0.0
    %172 = vmatmul.mubr.f32.gmra.mrb[0].mxu0 %v48
    %v173 = vpop.f32.mrb[0].mxu0
    %v174 = vadd.f32 %v80, %v173
    %v175 = vpop.f32.mrb[0].mxu0
    %176 = vmatprep.mubr.f32.mxu0 0.0
    %177 = vmatmul.mubr.f32.gmra.mrb[0].mxu0 %v49
    %v178 = vpop.f32.mrb[0].mxu0
    %v179 = vadd.f32 %v80, %v178
    %v180 = vpop.f32.mrb[0].mxu0
    %181 = vmatprep.mubr.f32.mxu0 0.0
    %182 = vmatmul.mubr.f32.gmra.mrb[0].mxu0 %v50
    %v183 = vpop.f32.mrb[0].mxu0
    %v184 = vadd.f32 %v80, %v183
    %v185 = vpop.f32.mrb[0].mxu0
    %186 = vmatprep.mubr.f32.mxu0 0.0
    %187 = vmatmul.mubr.f32.gmra.mrb[0].mxu0 %v51
    %v188 = vpop.f32.mrb[0].mxu0
    %v189 = vadd.f32 %v80, %v188
    %v190 = vpop.f32.mrb[0].mxu0
    %191 = vmatprep.mubr.f32.mxu0 0.0
    %192 = vmatmul.mubr.f32.gmra.mrb[0].mxu0 %v52
    %v193 = vpop.f32.mrb[0].mxu0
    %v194 = vadd.f32 %v80, %v193
    %v195 = vpop.f32.mrb[0].mxu0
    %196 = vmatprep.mubr.f32.mxu0 0.0
    %197 = vmatmul.mubr.f32.gmra.mrb[0].mxu0 %v53
    %v198 = vpop.f32.mrb[0].mxu0
    %v199 = vadd.f32 %v80, %v198
    %v200 = vpop.f32.mrb[0].mxu0
    %201 = vmatprep.mubr.f32.mxu0 0.0
    %202 = vmatmul.mubr.f32.gmra.mrb[0].mxu0 %v54
    %v203 = vpop.f32.mrb[0].mxu0
    %v204 = vadd.f32 %v80, %v203
    %v205 = vpop.f32.mrb[0].mxu0
    %206 = vmatprep.mubr.f32.mxu0 0.0
    %207 = vmatmul.mubr.f32.gmra.mrb[0].mxu0 %v55
    %v208 = vpop.f32.mrb[0].mxu0
    %v209 = vadd.f32 %v80, %v208
    %v210 = vpop.f32.mrb[0].mxu0
    %211 = vmatprep.mubr.f32.mxu0 0.0
    %212 = vmatmul.mubr.f32.gmra.mrb[0].mxu0 %v56
    %v213 = vpop.f32.mrb[0].mxu0
    %v214 = vadd.f32 %v80, %v213
    %v215 = vpop.f32.mrb[0].mxu0
    %216 = vmatprep.mubr.f32.mxu0 0.0
    %217 = vmatmul.mubr.f32.gmra.mrb[0].mxu0 %v57
    %v218 = vpop.f32.mrb[0].mxu0
    %v219 = vadd.f32 %v80, %v218
    %v220 = vpop.f32.mrb[0].mxu0
    %221 = vmatprep.mubr.f32.mxu0 0.0
    %222 = vmatmul.mubr.f32.gmra.mrb[0].mxu0 %v58
    %v223 = vpop.f32.mrb[0].mxu0
    %v224 = vadd.f32 %v80, %v223
    %v225 = vpop.f32.mrb[0].mxu0
    %226 = vdwg.mxu0
    %v227 = vxor.u32 %v149, 2147483648
    %v228 = vxor.u32 %v154, 2147483648
    %v229 = vxor.u32 %v159, 2147483648
    %v230 = vxor.u32 %v164, 2147483648
    %v231 = vxor.u32 %v169, 2147483648
    %v232 = vxor.u32 %v174, 2147483648
    %v233 = vxor.u32 %v179, 2147483648
    %v234 = vxor.u32 %v184, 2147483648
    %v235 = vxor.u32 %v189, 2147483648
    %v236 = vxor.u32 %v194, 2147483648
    %v237 = vxor.u32 %v199, 2147483648
    %v238 = vxor.u32 %v204, 2147483648
    %v239 = vxor.u32 %v209, 2147483648
    %v240 = vxor.u32 %v214, 2147483648
    %v241 = vxor.u32 %v219, 2147483648
    %v242 = vxor.u32 %v224, 2147483648
    %v243 = vmul.f32 %v227, 1.442695
    %v244 = vpow.pop %v243
    %v245 = vmul.f32 %v228, 1.442695
    %v246 = vpow.pop %v245
    %v247 = vmul.f32 %v229, 1.442695
    %v248 = vpow.pop %v247
    %v249 = vmul.f32 %v230, 1.442695
    %v250 = vpow.pop %v249
    %v251 = vmul.f32 %v231, 1.442695
    %v252 = vpow.pop %v251
    %v253 = vmul.f32 %v232, 1.442695
    %v254 = vpow.pop %v253
    %v255 = vmul.f32 %v233, 1.442695
    %v256 = vpow.pop %v255
    %v257 = vmul.f32 %v234, 1.442695
    %v258 = vpow.pop %v257
    %v259 = vmul.f32 %v235, 1.442695
    %v260 = vpow.pop %v259
    %v261 = vmul.f32 %v236, 1.442695
    %v262 = vpow.pop %v261
    %v263 = vmul.f32 %v237, 1.442695
    %v264 = vpow.pop %v263
    %v265 = vmul.f32 %v238, 1.442695
    %v266 = vpow.pop %v265
    %v267 = vmul.f32 %v239, 1.442695
    %v268 = vpow.pop %v267
    %v269 = vmul.f32 %v240, 1.442695
    %v270 = vpow.pop %v269
    %v271 = vmul.f32 %v241, 1.442695
    %v272 = vpow.pop %v271
    %v273 = vmul.f32 %v242, 1.442695
    %v274 = vpow.pop %v273
    %v275 = vadd.f32 %v244, 1.0
    %v276 = vadd.f32 %v246, 1.0
    %v277 = vadd.f32 %v248, 1.0
    %v278 = vadd.f32 %v250, 1.0
    %v279 = vadd.f32 %v252, 1.0
    %v280 = vadd.f32 %v254, 1.0
    %v281 = vadd.f32 %v256, 1.0
    %v282 = vadd.f32 %v258, 1.0
    %v283 = vadd.f32 %v260, 1.0
    %v284 = vadd.f32 %v262, 1.0
    %v285 = vadd.f32 %v264, 1.0
    %v286 = vadd.f32 %v266, 1.0
    %v287 = vadd.f32 %v268, 1.0
    %v288 = vadd.f32 %v270, 1.0
    %v289 = vadd.f32 %v272, 1.0
    %v290 = vadd.f32 %v274, 1.0
    %v291 = vrcp.pop %v275
    %v292 = vmul.f32 1.0, %v291
    %v293 = vrcp.pop %v276
    %v294 = vmul.f32 1.0, %v293
    %v295 = vrcp.pop %v277
    %v296 = vmul.f32 1.0, %v295
    %v297 = vrcp.pop %v278
    %v298 = vmul.f32 1.0, %v297
    %v299 = vrcp.pop %v279
    %v300 = vmul.f32 1.0, %v299
    %v301 = vrcp.pop %v280
    %v302 = vmul.f32 1.0, %v301
    %v303 = vrcp.pop %v281
    %v304 = vmul.f32 1.0, %v303
    %v305 = vrcp.pop %v282
    %v306 = vmul.f32 1.0, %v305
    %v307 = vrcp.pop %v283
    %v308 = vmul.f32 1.0, %v307
    %v309 = vrcp.pop %v284
    %v310 = vmul.f32 1.0, %v309
    %v311 = vrcp.pop %v285
    %v312 = vmul.f32 1.0, %v311
    %v313 = vrcp.pop %v286
    %v314 = vmul.f32 1.0, %v313
    %v315 = vrcp.pop %v287
    %v316 = vmul.f32 1.0, %v315
    %v317 = vrcp.pop %v288
    %v318 = vmul.f32 1.0, %v317
    %v319 = vrcp.pop %v289
    %v320 = vmul.f32 1.0, %v319
    %v321 = vrcp.pop %v290
    %v322 = vmul.f32 1.0, %v321
    %323 = vst [vmem:[#allocation7] sm:$0xff] %v292
    %324 = vst [vmem:[#allocation7 + $0x8] sm:$0xff] %v294
    %325 = vst [vmem:[#allocation7 + $0x10] sm:$0xff] %v296
    %326 = vst [vmem:[#allocation7 + $0x18] sm:$0xff] %v298
    %327 = vst [vmem:[#allocation7 + $0x20] sm:$0xff] %v300
    %328 = vst [vmem:[#allocation7 + $0x28] sm:$0xff] %v302
    %329 = vst [vmem:[#allocation7 + $0x30] sm:$0xff] %v304
    %330 = vst [vmem:[#allocation7 + $0x38] sm:$0xff] %v306
    %331 = vst [vmem:[#allocation7 + $0x40] sm:$0xff] %v308
    %332 = vst [vmem:[#allocation7 + $0x48] sm:$0xff] %v310
    %333 = vst [vmem:[#allocation7 + $0x50] sm:$0xff] %v312
    %334 = vst [vmem:[#allocation7 + $0x58] sm:$0xff] %v314
    %335 = vst [vmem:[#allocation7 + $0x60] sm:$0xff] %v316
    %336 = vst [vmem:[#allocation7 + $0x68] sm:$0xff] %v318
    %337 = vst [vmem:[#allocation7 + $0x70] sm:$0xff] %v320
    %338 = vst [vmem:[#allocation7 + $0x78] sm:$0xff] %v322
    // Predicated region
    $region22: #{tpu_custom_call.1} parent=1 // pred_check
      _
    $region23: #{tpu_custom_call.1} parent=1 // pred_check_branch
      %340 = sbr.rel (0) target = $region25
    $region24: #{tpu_custom_call.1} parent=1 // pred_region
      %s342 = ssub.s32 2048, 2048
      %343 = vsyncadd [#allocation4], %s342
      %s344 = sshll.u32 [#allocation7], 4
      %s345 = int_to_ptr.vmem [resolvable:$true] %s344
      %350 = dma.vmem_to_hbm [thread:$0]  %s345, 2048, %s3, [#allocation4], 128, 128, 8
    $region25: #{tpu_custom_call.1} parent=1 // pred_fallthru
      _
    // Predicated region
    $region26: #{tpu_custom_call.1} parent=1 // pred_check
      _
    $region27: #{tpu_custom_call.1} parent=1 // pred_check_branch
      %352 = sbr.rel (0) target = $region29
    $region28: #{tpu_custom_call.1} parent=1 // pred_region
      %353 = dma.done [#allocation4], 2048
    $region29: #{tpu_custom_call.1} parent=1 // pred_fallthru
      _
    %354 = vsyncpa [#allocation3], 1
    %355 = vsyncpa [#allocation6], 1
    %356 = vsyncpa [#allocation4], 1

</llo_original>
